<compile_context>
chip_gen: v6e
topology: v6e:2x2x1
jax: 0.10.0
libtpu: 0.0.40
codegen_flags: <defaults>
</compile_context>

<pallas_src>
import functools

import jax
import jax.numpy as jnp
from jax.experimental import pallas as pl
from jax.experimental.pallas import tpu as pltpu

IN_FEATURES = 64
OUT_FEATURES = 128

_MAX_TILE = 2048             # rows per grid step in the tiled path (~1.5 MiB/step)
_SINGLE_SHOT_MAX_ROWS = 8192 # x+out footprint <= 8192*(64+128)*4 B = 6 MiB
_MIN_GRID_STEPS = 4          # keep >=2 steps per v7x TensorCore + pipeline overlap
_ROW_BYTES = (IN_FEATURES + OUT_FEATURES) * 4  # f32 x-row + out-row


def _round_up(x: int, m: int) -> int:
    return ((x + m - 1) // m) * m


def _make_linear_clamp_kernel(clamp_min: float, clamp_max: float):
    # clamp_min / clamp_max are closure-captured Python floats -> folded into
    # the kernel as immediates; no per-call host->device scalar transfers.
    def kernel(x_ref, w_ref, b_ref, o_ref):
        y = jnp.dot(x_ref[...], w_ref[...], preferred_element_type=jnp.float32)
        y = y + b_ref[...]                 # broadcast bias (1, OUT)
        y = jnp.maximum(y, clamp_min)      # torch.clamp_min
        y = jnp.minimum(y, clamp_max)      # torch.clamp_max
        o_ref[...] = y.astype(o_ref.dtype)

    return kernel


def _single_shot_call(kernel, rows):
    """Gridless whole-array VMEM call: one DMA-in / compute / DMA-out."""
    return pl.pallas_call(
        kernel,
        out_shape=jax.ShapeDtypeStruct((rows, OUT_FEATURES), jnp.float32),
        in_specs=[
            pl.BlockSpec(memory_space=pltpu.MemorySpace.VMEM),  # x
            pl.BlockSpec(memory_space=pltpu.MemorySpace.VMEM),  # w (IN, OUT)
            pl.BlockSpec(memory_space=pltpu.MemorySpace.VMEM),  # bias (1, OUT)
        ],
        out_specs=pl.BlockSpec(memory_space=pltpu.MemorySpace.VMEM),
        cost_estimate=pl.CostEstimate(
            flops=2 * rows * IN_FEATURES * OUT_FEATURES,
            transcendentals=0,
            bytes_accessed=rows * _ROW_BYTES + IN_FEATURES * OUT_FEATURES * 4
            + OUT_FEATURES * 4,
        ),
    )


@functools.partial(jax.jit, static_argnames=("clamp_min", "clamp_max"))
def model_forward(x, w, b2d, *, clamp_min, clamp_max):
    """x: (B, 64); w: (64, 128) (transposed PyTorch weight); b2d: (1, 128)."""
    B = x.shape[0]
    kernel = _make_linear_clamp_kernel(float(clamp_min), float(clamp_max))

    if B < 8:
        # Pad rows to a full (8, 128) output tile so the store is unmasked;
        # launch-latency dominated regime anyway.
        x_pad = jnp.zeros((8, IN_FEATURES), x.dtype).at[:B].set(x)
        out = _single_shot_call(kernel, 8)(x_pad, w, b2d)
        return out[:B]

    if B <= _SINGLE_SHOT_MAX_ROWS:
        # Whole working set (<= ~6 MiB + 32 KiB weight) fits VMEM on all
        # generations; a single shot beats any grid at these sizes.
        return _single_shot_call(kernel, B)(x, w, b2d)

    # Tiled path for large batches. cdiv grid: Pallas masks the partial last
    # tile, so no whole-array fallback can ever blow past VMEM (v7x: 64 MiB).
    tile = min(_MAX_TILE, _round_up(pl.cdiv(B, _MIN_GRID_STEPS), 8))
    grid = pl.cdiv(B, tile)
    # Double-buffered x+out tiles plus resident weight/bias, with headroom.
    vmem_bytes = 4 * tile * _ROW_BYTES + IN_FEATURES * OUT_FEATURES * 4 * 2 + (1 << 20)

    return pl.pallas_call(
        kernel,
        out_shape=jax.ShapeDtypeStruct((B, OUT_FEATURES), jnp.float32),
        grid=(grid,),
        in_specs=[
            pl.BlockSpec((tile, IN_FEATURES), lambda i: (i, 0)),
            pl.BlockSpec((IN_FEATURES, OUT_FEATURES), lambda i: (0, 0)),
            pl.BlockSpec((1, OUT_FEATURES), lambda i: (0, 0)),
        ],
        out_specs=pl.BlockSpec((tile, OUT_FEATURES), lambda i: (i, 0)),
        compiler_params=pltpu.CompilerParams(
            dimension_semantics=("parallel",),  # shards grid across v7x's 2 TCs
            vmem_limit_bytes=vmem_bytes,
        ),
        cost_estimate=pl.CostEstimate(
            flops=2 * B * IN_FEATURES * OUT_FEATURES,
            transcendentals=0,
            bytes_accessed=B * _ROW_BYTES + IN_FEATURES * OUT_FEATURES * 4
            + OUT_FEATURES * 4,
        ),
    )(x, w, b2d)


if __name__ == "__main__":
    key = jax.random.PRNGKey(0)
    kx, kw, kb, kmid, kbig = jax.random.split(key, 5)

    # Deterministic parameter init (mimic nn.Linear's uniform init bounds).
    bound = IN_FEATURES ** -0.5
    w_pt = jax.random.uniform(kw, (OUT_FEATURES, IN_FEATURES), jnp.float32, -bound, bound)
    b = jax.random.uniform(kb, (OUT_FEATURES,), jnp.float32, -bound, bound)
    # Parameter-setup-time layout work (hoisted out of the per-call path):
    w = jnp.asarray(w_pt.T)                 # (IN, OUT) kernel layout
    b2d = b.reshape(1, OUT_FEATURES)        # (1, OUT)

    def ref_fn(x, lo, hi):
        return jnp.minimum(jnp.maximum(x @ w + b2d, lo), hi)

    # Module-native shape (1, 64); clamp (-0.5, 0.5) so the matmul/bias path is
    # actually validated (values survive the clamp).
    x1 = jax.random.normal(kx, (1, IN_FEATURES), jnp.float32)
    out = jax.block_until_ready(model_forward(x1, w, b2d, clamp_min=-0.5, clamp_max=0.5))
    assert out.shape == (1, OUT_FEATURES)
    assert jnp.allclose(out, ref_fn(x1, -0.5, 0.5), atol=1e-5, rtol=1e-5)

    # Spec's default bounds __min__ = __max___ = 1 (degenerate constant output).
    out_spec = jax.block_until_ready(model_forward(x1, w, b2d, clamp_min=1.0, clamp_max=1.0))
    assert jnp.allclose(out_spec, ref_fn(x1, 1.0, 1.0), atol=1e-5, rtol=1e-5)

    # Mid batch: single-shot whole-array path (no grid bookkeeping).
    xm = jax.random.normal(kmid, (512, IN_FEATURES), jnp.float32)
    outm = jax.block_until_ready(model_forward(xm, w, b2d, clamp_min=-0.5, clamp_max=0.5))
    assert outm.shape == (512, OUT_FEATURES)
    assert jnp.allclose(outm, ref_fn(xm, -0.5, 0.5), atol=1e-5, rtol=1e-5)

    # Large non-multiple batch: exercises the cdiv tiled path with a masked
    # partial last tile (previously would have hit the whole-array fallback).
    xb = jax.random.normal(kbig, (9000, IN_FEATURES), jnp.float32)
    outb = jax.block_until_ready(model_forward(xb, w, b2d, clamp_min=-0.5, clamp_max=0.5))
    assert outb.shape == (9000, OUT_FEATURES)
    assert jnp.allclose(outb, ref_fn(xb, -0.5, 0.5), atol=1e-5, rtol=1e-5)

    print("KERNEL_OK")
</pallas_src>

<mosaic_0001>
module attributes {stable_mosaic.version = 11 : i64} {
  func.func @kernel(%arg0: memref<8x64xf32, #tpu.memory_space<vmem>>, %arg1: memref<64x128xf32, #tpu.memory_space<vmem>>, %arg2: memref<1x128xf32, #tpu.memory_space<vmem>>, %arg3: memref<8x128xf32, #tpu.memory_space<vmem>>) attributes {dimension_semantics = [], scalar_prefetch = 0 : i64, scratch_operands = 0 : i64, tpu.core_type = #tpu.core_type<tc>} {
    %c0 = arith.constant 0 : index
    %c0_0 = arith.constant 0 : index
    %0 = vector.load %arg0[%c0, %c0_0] : memref<8x64xf32, #tpu.memory_space<vmem>>, vector<8x64xf32>
    %c0_1 = arith.constant 0 : index
    %c0_2 = arith.constant 0 : index
    %1 = vector.load %arg1[%c0_1, %c0_2] : memref<64x128xf32, #tpu.memory_space<vmem>>, vector<64x128xf32>
    %cst = arith.constant dense<0.000000e+00> : vector<8x128xf32>
    %2 = tpu.matmul %0, %1, %cst {dimension_numbers = #tpu.dot_dimension_numbers<[1], [0], [0], [1], [0, 0, 1, 1], [], []>} : vector<8x64xf32>, vector<64x128xf32>, vector<8x128xf32> -> vector<8x128xf32>
    %c0_3 = arith.constant 0 : index
    %c0_4 = arith.constant 0 : index
    %3 = vector.load %arg2[%c0_3, %c0_4] : memref<1x128xf32, #tpu.memory_space<vmem>>, vector<1x128xf32>
    %4 = vector.broadcast %3 : vector<1x128xf32> to vector<8x128xf32>
    %5 = arith.addf %2, %4 : vector<8x128xf32>
    %cst_5 = arith.constant -5.000000e-01 : f32
    %6 = vector.broadcast %cst_5 : f32 to vector<8x128xf32>
    %7 = arith.maximumf %5, %6 : vector<8x128xf32>
    %cst_6 = arith.constant 5.000000e-01 : f32
    %8 = vector.broadcast %cst_6 : f32 to vector<8x128xf32>
    %9 = arith.minimumf %7, %8 : vector<8x128xf32>
    %c0_7 = arith.constant 0 : index
    %c0_8 = arith.constant 0 : index
    %10 = vector.load %arg3[%c0_7, %c0_8] : memref<8x128xf32, #tpu.memory_space<vmem>>, vector<8x128xf32>
    tpu.vector_store %arg3[%c0_7, %c0_8], %9 {strides = array<i32>} : memref<8x128xf32, #tpu.memory_space<vmem>>, vector<8x128xf32>,
    return
  }
}

</mosaic_0001>

<llo_original>
// kernel: model_forward.1
$region0: #{model_forward.1}
  #allocation0 [shape = 'u32[]', space=smem, size = 0x4, offset = 0x4, fixed_abs, tag = 'smem constant byte address 0x4 - core index']
  #allocation1 [shape = 'u32[144,128]{1,0:T(1,128)}', space=vmem, size = 0x12000, scoped, tag = 'internal scratch']
  %s0 = inlined_call_operand.vmem [shape: f32[8,64], index: 0, kind: input, shape index: {}]
  %s1 = inlined_call_operand.hbm [shape: f32[64,128], index: 1, kind: input, shape index: {}]
  %s2 = inlined_call_operand.vmem [shape: f32[1,128], index: 2, kind: input, shape index: {}]
  %s3 = inlined_call_operand.vmem [shape: f32[8,128], index: 3, kind: output, shape index: {}]
  %s4 = sld [smem:[#allocation0]]
  $region26: #{model_forward.1} parent=0
    _
  %s6 = ssub.s32 1, %s4
  %s7 = scalar_select 0, %s6, %s4
  $region1: #{model_forward.1} parent=0
    #allocation2 [shape = 'u8[32768]{0}', space=vmem, size = 0x8000, scoped, tag = 'input window, operand 1, single buffered']
    #allocation3 [shape = 's32[1]{0}', space=sflag, size = 0x4, scoped, tag = 'scoped memory for model_forward.1']
    %8 = vsyncpa [#allocation3], 0
    // Predicated region
    $region2: #{model_forward.1} parent=1 // pred_check
      _
    $region3: #{model_forward.1} parent=1 // pred_check_branch
      %10 = sbr.rel (0) target = $region5
    $region4: #{model_forward.1} parent=1 // pred_region
      _
    $region5: #{model_forward.1} parent=1 // pred_fallthru
      _
    // Predicated region
    $region6: #{model_forward.1} parent=1 // pred_check
      _
    $region7: #{model_forward.1} parent=1 // pred_check_branch
      %12 = sbr.rel (0) target = $region9
    $region8: #{model_forward.1} parent=1 // pred_region
      %s14 = ssub.s32 1024, 1024
      %15 = vsyncadd [#allocation3], %s14
      %s16 = sshll.u32 [#allocation2], 4
      %s17 = int_to_ptr.vmem [resolvable:$true] %s16
      %22 = dma.hbm_to_vmem [thread:$0]  %s1, 1024, %s17, [#allocation3], 128, 128, 8
    $region9: #{model_forward.1} parent=1 // pred_fallthru
      _
    // Predicated region
    $region10: #{model_forward.1} parent=1 // pred_check
      _
    $region11: #{model_forward.1} parent=1 // pred_check_branch
      %24 = sbr.rel (0) target = $region13
    $region12: #{model_forward.1} parent=1 // pred_region
      _
    $region13: #{model_forward.1} parent=1 // pred_fallthru
      _
    // Predicated region
    $region14: #{model_forward.1} parent=1 // pred_check
      _
    $region15: #{model_forward.1} parent=1 // pred_check_branch
      %26 = sbr.rel (0) target = $region17
    $region16: #{model_forward.1} parent=1 // pred_region
      %27 = dma.done [#allocation3], 1024
    $region17: #{model_forward.1} parent=1 // pred_fallthru
      _
    %v28 = vld [vmem:[%s0] sm:$0xff]
    %v29 = vld [vmem:[#allocation2] sm:$0xff]
    %v30 = vld [vmem:[#allocation2 + $0x8] sm:$0xff]
    %v31 = vld [vmem:[#allocation2 + $0x10] sm:$0xff]
    %v32 = vld [vmem:[#allocation2 + $0x18] sm:$0xff]
    %v33 = vld [vmem:[#allocation2 + $0x20] sm:$0xff]
    %v34 = vld [vmem:[#allocation2 + $0x28] sm:$0xff]
    %v35 = vld [vmem:[#allocation2 + $0x30] sm:$0xff]
    %v36 = vld [vmem:[#allocation2 + $0x38] sm:$0xff]
    %v37 = vld [vmem:[%s2] sm:$0x1]
    %v39 = vlaneseq
    %v40 = vshrl.u32 %v39, 7
    %v41 = vsub.s32 0, %v40
    %v42 = vrot.slane %v37, %v41
    %vm44 = vcmask 523264
    %v46 = vsel %vm44, %v28, 0
    %48 = vmatprep.subr.mxu0 0.0
    %49 = vmatpush1.msra.mxu0 0.0
    %50 = vmatprep.subr.mxu0 0.0
    %51 = vmatpush1.msra.mxu0 0.0
    %52 = vmatprep.subr.mxu0 0.0
    %53 = vmatpush1.msra.mxu0 0.0
    %54 = vmatprep.subr.mxu0 0.0
    %55 = vmatpush1.msra.mxu0 0.0
    %56 = vmatprep.subr.mxu0 0.0
    %57 = vmatpush1.msra.mxu0 0.0
    %58 = vmatprep.subr.mxu0 0.0
    %59 = vmatpush1.msra.mxu0 0.0
    %60 = vmatprep.subr.mxu0 0.0
    %61 = vmatpush1.msra.mxu0 0.0
    %62 = vmatprep.subr.mxu0 0.0
    %63 = vmatpush1.msra.mxu0 0.0
    %64 = vmatprep.subr.mxu0 0.0
    %65 = vmatpush1.msra.mxu0 %v36
    %66 = vmatprep.subr.mxu0 0.0
    %67 = vmatpush1.msra.mxu0 %v35
    %68 = vmatprep.subr.mxu0 0.0
    %69 = vmatpush1.msra.mxu0 %v34
    %70 = vmatprep.subr.mxu0 0.0
    %71 = vmatpush1.msra.mxu0 %v33
    %72 = vmatprep.subr.mxu0 0.0
    %73 = vmatpush1.msra.mxu0 %v32
    %74 = vmatprep.subr.mxu0 0.0
    %75 = vmatpush1.msra.mxu0 %v31
    %76 = vmatprep.subr.mxu0 0.0
    %77 = vmatpush1.msra.mxu0 %v30
    %78 = vmatprep.subr.mxu0 0.0
    %79 = vmatpush1.msra.mxu0 %v29
    %80 = vmatprep.subr.mxu0 0.0
    %81 = vmatpush2.msra.mxu0 0.0
    %82 = vmatprep.subr.mxu0 0.0
    %83 = vmatpush2.msra.mxu0 0.0
    %84 = vmatprep.subr.mxu0 0.0
    %85 = vmatpush2.msra.mxu0 0.0
    %86 = vmatprep.subr.mxu0 0.0
    %87 = vmatpush2.msra.mxu0 0.0
    %88 = vmatprep.subr.mxu0 0.0
    %89 = vmatpush2.msra.mxu0 0.0
    %90 = vmatprep.subr.mxu0 0.0
    %91 = vmatpush2.msra.mxu0 0.0
    %92 = vmatprep.subr.mxu0 0.0
    %93 = vmatpush2.msra.mxu0 0.0
    %94 = vmatprep.subr.mxu0 0.0
    %95 = vmatpush2.msra.mxu0 0.0
    %96 = vmatprep.subr.mxu0 0.0
    %97 = vmatpush2.msra.mxu0 0.0
    %98 = vmatprep.subr.mxu0 0.0
    %99 = vmatpush2.msra.mxu0 0.0
    %100 = vmatprep.subr.mxu0 0.0
    %101 = vmatpush2.msra.mxu0 0.0
    %102 = vmatprep.subr.mxu0 0.0
    %103 = vmatpush2.msra.mxu0 0.0
    %104 = vmatprep.subr.mxu0 0.0
    %105 = vmatpush2.msra.mxu0 0.0
    %106 = vmatprep.subr.mxu0 0.0
    %107 = vmatpush2.msra.mxu0 0.0
    %108 = vmatprep.subr.mxu0 0.0
    %109 = vmatpush2.msra.mxu0 0.0
    %110 = vmatprep.subr.mxu0 0.0
    %111 = vmatpush2.msra.mxu0 0.0
    %112 = vmatprep.mubr.f32.mxu0 0.0
    %113 = vmatmul.mubr.f32.gmra.mxu0 %v46
    %v114 = vpop.f32.mrf.mxu0
    %v115 = vadd.f32 %v42, %v114
    %v116 = vpop.f32.mrf.mxu0
    %117 = vdwg.mxu0
    %v118 = vmax.f32 %v115, -0.5
    %v119 = vmin.f32 %v118, 0.5
    %120 = vst [vmem:[%s3] sm:$0xff] %v119
    // Predicated region
    $region18: #{model_forward.1} parent=1 // pred_check
      _
    $region19: #{model_forward.1} parent=1 // pred_check_branch
      %122 = sbr.rel (0) target = $region21
    $region20: #{model_forward.1} parent=1 // pred_region
      _
    $region21: #{model_forward.1} parent=1 // pred_fallthru
      _
    // Predicated region
    $region22: #{model_forward.1} parent=1 // pred_check
      _
    $region23: #{model_forward.1} parent=1 // pred_check_branch
      %124 = sbr.rel (0) target = $region25
    $region24: #{model_forward.1} parent=1 // pred_region
      _
    $region25: #{model_forward.1} parent=1 // pred_fallthru
      _
    %125 = vsyncpa [#allocation3], 1

</llo_original>
